<compile_context>
chip_gen: v6e
topology: v6e:2x2x1
jax: 0.10.0
libtpu: 0.0.40
codegen_flags: <defaults>
</compile_context>

<pallas_src>
import functools
import math

import jax
import jax.numpy as jnp
from jax import lax
from jax.experimental import pallas as pl
from jax.experimental.pallas import tpu as pltpu


def _layer_norm_kernel(x_ref, gb_ref, o_ref, *, eps, has_beta):
    # x_ref : (TM, H) row tile (pipelined over HBM)
    # gb_ref: (1, H) gamma, or (2, H) stacked [gamma; beta]; VMEM-resident.
    x = x_ref[...].astype(jnp.float32)                      # f32 compute path
    mean = jnp.mean(x, axis=-1, keepdims=True)              # cross-lane reduce (XLU)
    xc = x - mean
    var = jnp.mean(xc * xc, axis=-1, keepdims=True)         # biased variance (PyTorch)
    inv = lax.rsqrt(var + eps)                              # EUP rsqrt (free slot)
    y = (xc * inv) * gb_ref[0:1, :].astype(jnp.float32)
    if has_beta:
        y = y + gb_ref[1:2, :].astype(jnp.float32)
    o_ref[...] = y.astype(o_ref.dtype)                      # lane-dense full-H store


def _pick_vmem_limit_bytes():
    """Generation-aware scoped-VMEM limit: ~48 MiB on v7x (64 MiB physical),
    ~96 MiB on v5e/v6e (128 MiB physical). Falls back to the v7x-safe value."""
    default = 48 * 1024 * 1024
    try:
        cap = getattr(pltpu.get_tpu_info(), "vmem_capacity_bytes", None)
    except Exception:
        cap = None
    if cap is None:
        return default
    if cap >= 96 * 1024 * 1024:          # v5e / v6e: 128 MiB physical VMEM
        return 96 * 1024 * 1024
    return min(default, (cap * 3) // 4)  # v7x: 64 MiB physical VMEM


def _choose_block_rows(m, h, itemsize, vmem_budget_bytes, *,
                       max_rows=16384, min_steps=8):
    """Largest row tile (multiple of 8) such that
       2x in + 2x out double buffers + ~3 f32 (TM,H) intermediates fit the
       budget, while keeping the grid at >= min_steps steps (DMA/compute
       overlap + v7x 2-TC split)."""
    bytes_per_row = h * (4 * itemsize + 3 * 4)      # dbl-buffered io + f32 temps
    rows = vmem_budget_bytes // bytes_per_row
    rows = max(8, min(max_rows, rows))
    # Never collapse to a ~single-step grid: cap rows so grid >= min_steps.
    rows_for_steps = max(8, (pl.cdiv(m, min_steps) // 8) * 8)
    rows = min(rows, rows_for_steps)
    rows = max(8, (rows // 8) * 8)
    return rows


def layer_norm(x, gamma, beta=None, *, eps=1e-5):
    """y = LayerNorm(x) over the last dim; beta=None folds out the zero buffer."""
    orig_shape = x.shape
    H = orig_shape[-1]
    M = math.prod(orig_shape[:-1]) if len(orig_shape) > 1 else 1
    x2 = x.reshape(M, H)

    has_beta = beta is not None
    if has_beta:
        gb = jnp.stack([gamma.reshape(H), beta.reshape(H)], axis=0)   # (2, H)
    else:
        gb = gamma.reshape(1, H)                                      # (1, H)
    n_aff = gb.shape[0]

    itemsize = jnp.dtype(x.dtype).itemsize
    vmem_limit = _pick_vmem_limit_bytes()
    tm = _choose_block_rows(M, H, itemsize, (vmem_limit * 3) // 4)

    grid = pl.cdiv(M, tm)   # ragged last block handled in-kernel by Pallas masking

    kern = functools.partial(_layer_norm_kernel, eps=eps, has_beta=has_beta)

    out = pl.pallas_call(
        kern,
        out_shape=jax.ShapeDtypeStruct((M, H), x.dtype),
        grid_spec=pltpu.PrefetchScalarGridSpec(
            num_scalar_prefetch=0,
            grid=(grid,),
            in_specs=[
                pl.BlockSpec((tm, H), lambda i: (i, 0)),      # row tile, pipelined
                pl.BlockSpec((n_aff, H), lambda i: (0, 0)),   # gamma[/beta], resident
            ],
            out_specs=pl.BlockSpec((tm, H), lambda i: (i, 0)),
        ),
        compiler_params=pltpu.CompilerParams(
            dimension_semantics=("parallel",),   # v7x: shard row tiles over 2 TCs
            vmem_limit_bytes=vmem_limit,
        ),
        cost_estimate=pl.CostEstimate(
            flops=8 * M * H,
            transcendentals=M,                   # one rsqrt per row
            bytes_accessed=2 * M * H * itemsize
            + n_aff * H * jnp.dtype(gamma.dtype).itemsize,
        ),
    )(x2, gb)

    return out.reshape(orig_shape)


if __name__ == "__main__":
    key = jax.random.PRNGKey(0)
    kx, kg, kb = jax.random.split(key, 3)

    # Small shapes consistent with the module: (batch, seq, hidden).
    # S chosen so M = B*S is NOT a multiple of the row tile -> exercises the
    # in-kernel ragged last block (no host pad/slice).
    B, S, H = 2, 11, 128
    x = jax.random.normal(kx, (B, S, H), dtype=jnp.float32)
    gamma = 1.0 + 0.02 * jax.random.normal(kg, (H,), dtype=jnp.float32)
    beta_zero = jnp.zeros((H,), dtype=jnp.float32)           # module's registered buffer

    # Path 1: module-faithful call (beta is the zero buffer -> folded out).
    y = layer_norm(x, gamma, beta=None)
    y = jax.block_until_ready(y)

    mean = jnp.mean(x, axis=-1, keepdims=True)
    var = jnp.var(x, axis=-1, keepdims=True)
    y_ref = (x - mean) * lax.rsqrt(var + 1e-5) * gamma + beta_zero

    assert y.shape == x.shape and y.dtype == x.dtype
    assert jnp.allclose(y, y_ref, atol=1e-4, rtol=1e-4)

    # Path 2: general affine path with a non-zero beta (sanity check).
    beta = 0.1 * jax.random.normal(kb, (H,), dtype=jnp.float32)
    y2 = jax.block_until_ready(layer_norm(x, gamma, beta))
    y2_ref = (x - mean) * lax.rsqrt(var + 1e-5) * gamma + beta
    assert jnp.allclose(y2, y2_ref, atol=1e-4, rtol=1e-4)

    print("KERNEL_OK")
</pallas_src>

<mosaic_0001>
module attributes {stable_mosaic.version = 11 : i64} {
  func.func @_layer_norm_kernel(%arg0: i32, %arg1: memref<8x128xf32, #tpu.memory_space<vmem>>, %arg2: memref<1x128xf32, #tpu.memory_space<vmem>>, %arg3: memref<8x128xf32, #tpu.memory_space<vmem>>) attributes {dimension_semantics = [#tpu.dimension_semantics<parallel>], iteration_bounds = array<i64: 3>, scalar_prefetch = 0 : i64, scratch_operands = 0 : i64, tpu.core_type = #tpu.core_type<tc>, window_params = [{transform_indices = @transform_0, window_bounds = array<i64: 8, 128>}, {pipeline_mode = #tpu.pipeline_mode<synchronous>, transform_indices = @transform_1, window_bounds = array<i64: 1, 128>}, {transform_indices = @transform_2, window_bounds = array<i64: 8, 128>}]} {
    %c0 = arith.constant 0 : index
    %c0_0 = arith.constant 0 : index
    %0 = vector.load %arg1[%c0, %c0_0] : memref<8x128xf32, #tpu.memory_space<vmem>>, vector<8x128xf32>
    %cst = arith.constant dense<0.000000e+00> : vector<8xf32>
    %1 = vector.multi_reduction <add>, %0, %cst [1] : vector<8x128xf32> to vector<8xf32>
    %2 = vector.shape_cast %1 : vector<8xf32> to vector<8x1xf32>
    %cst_1 = arith.constant 1.280000e+02 : f32
    %3 = vector.broadcast %cst_1 : f32 to vector<8x1xf32>
    %4 = arith.divf %2, %3 : vector<8x1xf32>
    %5 = vector.broadcast %4 : vector<8x1xf32> to vector<8x128xf32>
    %6 = arith.subf %0, %5 : vector<8x128xf32>
    %7 = arith.mulf %6, %6 : vector<8x128xf32>
    %cst_2 = arith.constant dense<0.000000e+00> : vector<8xf32>
    %8 = vector.multi_reduction <add>, %7, %cst_2 [1] : vector<8x128xf32> to vector<8xf32>
    %9 = vector.shape_cast %8 : vector<8xf32> to vector<8x1xf32>
    %cst_3 = arith.constant 1.280000e+02 : f32
    %10 = vector.broadcast %cst_3 : f32 to vector<8x1xf32>
    %11 = arith.divf %9, %10 : vector<8x1xf32>
    %cst_4 = arith.constant 9.99999974E-6 : f32
    %12 = vector.broadcast %cst_4 : f32 to vector<8x1xf32>
    %13 = arith.addf %11, %12 : vector<8x1xf32>
    %14 = math.rsqrt %13 : vector<8x1xf32>
    %15 = vector.broadcast %14 : vector<8x1xf32> to vector<8x128xf32>
    %16 = arith.mulf %6, %15 : vector<8x128xf32>
    %c0_5 = arith.constant 0 : index
    %c0_6 = arith.constant 0 : index
    %17 = vector.load %arg2[%c0_5, %c0_6] : memref<1x128xf32, #tpu.memory_space<vmem>>, vector<1x128xf32>
    %18 = vector.broadcast %17 : vector<1x128xf32> to vector<8x128xf32>
    %19 = arith.mulf %16, %18 : vector<8x128xf32>
    %c0_7 = arith.constant 0 : index
    %c0_8 = arith.constant 0 : index
    %20 = vector.load %arg3[%c0_7, %c0_8] : memref<8x128xf32, #tpu.memory_space<vmem>>, vector<8x128xf32>
    tpu.vector_store %arg3[%c0_7, %c0_8], %19 {strides = array<i32>} : memref<8x128xf32, #tpu.memory_space<vmem>>, vector<8x128xf32>,
    return
  }
  func.func @transform_0(%arg0: i32) -> (i32, i32) {
    %c0_i32 = arith.constant 0 : i32
    %c0_i32_0 = arith.constant 0 : i32
    return %arg0, %c0_i32 : i32, i32
  }
  func.func @transform_1(%arg0: i32) -> (i32, i32) {
    %c0_i32 = arith.constant 0 : i32
    %c0_i32_0 = arith.constant 0 : i32
    %c0_i32_1 = arith.constant 0 : i32
    return %c0_i32, %c0_i32_0 : i32, i32
  }
  func.func @transform_2(%arg0: i32) -> (i32, i32) {
    %c0_i32 = arith.constant 0 : i32
    %c0_i32_0 = arith.constant 0 : i32
    return %arg0, %c0_i32 : i32, i32
  }
}

</mosaic_0001>

<llo_original>
// kernel: tpu_custom_call.1
$region0: #{tpu_custom_call.1}
  #allocation0 [shape = 'u32[]', space=smem, size = 0x4, offset = 0x4, fixed_abs, tag = 'smem constant byte address 0x4 - core index']
  #allocation1 [shape = 'u32[144,128]{1,0:T(1,128)}', space=vmem, size = 0x12000, scoped, tag = 'internal scratch']
  %s0 = inlined_call_operand.hbm [shape: f32[22,128], index: 0, kind: input, shape index: {}]
  %s1 = inlined_call_operand.vmem [shape: f32[1,128], index: 1, kind: input, shape index: {}]
  %s2 = inlined_call_operand.hbm [shape: f32[22,128], index: 2, kind: output, shape index: {}]
  %s3 = sld [smem:[#allocation0]]
  $region45: #{tpu_custom_call.1} parent=0
    _
  %s5 = ssub.s32 1, %s3
  %s6 = scalar_select 0, %s5, %s3
  $region1: #{tpu_custom_call.1} parent=0
    #allocation2 [shape = 'u8[8192]{0}', space=vmem, size = 0x2000, scoped, tag = 'input window, operand 0']
    #allocation3 [shape = 's32[2]{0}', space=sflag, size = 0x8, scoped, tag = 'scoped memory for tpu_custom_call.1']
    #allocation4 [shape = 's32[2]{0}', space=sflag, size = 0x8, scoped, tag = 'scoped memory for tpu_custom_call.1']
    #allocation5 [shape = 'u8[8192]{0}', space=vmem, size = 0x2000, scoped, tag = 'output window, operand 0']
    %7 = vsyncpa [#allocation3], 0
    %s8 = scalar_lea.sflag [#allocation3], 1
    %9 = vsyncpa %s8, 0
    %10 = vsyncpa [#allocation4], 0
    %s11 = scalar_lea.sflag [#allocation4], 1
    %12 = vsyncpa %s11, 0
    loop: start=0, step=1, limit=5
    $region2: #{tpu_custom_call.1} parent=1 // loop_pre_header
      _
    $region3: #{tpu_custom_call.1} parent=1 // loop_header
      %s14 = sphi 0, %s18
      %p15 = scmp.ge.s32.totalorder %s14, 5
      %s24 = sphi 0, %s26
      %s27 = sphi 0, %s24
      %s28 = sphi 0, %s27
      %s44 = sphi 0, %s28
      %s48 = sphi 0, %s48
      %s50 = sphi 0, %s48
      %s51 = sphi 0, %s50
      %s65 = sphi 0, %s51
      %s71 = sphi 0, %s73
      %s74 = sphi 0, %s71
      %s75 = sphi 0, %s74
      %s91 = sphi 0, %s75
    $region4: #{tpu_custom_call.1} parent=1 // loop_header_branch
      %17 = sbr.rel (%p15) target = $region8
    $region5: #{tpu_custom_call.1} parent=1 // loop_body
      %s19 = ssub.s32 %s14, 1
      %s20 = ssub.s32 %s14, 2
      %s21 = sadd.s32 %s14, 1
      %s22 = ssub.s32 %s14, %s21
      %p23 = scmp.eq.s32.totalorder %s22, 0
      %s25 = sadd.s32 %s24, 1
      %s26 = scalar_select %p23, %s24, %s25
      %p29 = pneg %p23
      %p30 = scmp.eq.s32.totalorder %s14, 2
      %p31 = por %p29, %p30
      %p32 = scmp.ne.s32.totalorder %s24, %s27
      %p33 = scmp.eq.s32.totalorder %s14, 0
      %p34 = por %p32, %p33
      %p35 = scmp.ne.s32.totalorder %s24, %s27
      %p36 = scmp.eq.s32.totalorder %s19, 2
      %p37 = por %p35, %p36
      %p38 = scmp.ne.s32.totalorder %s27, %s28
      %p39 = scmp.eq.s32.totalorder %s19, 0
      %p40 = por %p38, %p39
      %p41 = scmp.ne.s32.totalorder %s27, %s28
      %p42 = scmp.eq.s32.totalorder %s20, 2
      %p43 = por %p41, %p42
      %p45 = scmp.ne.s32.totalorder %s28, %s44
      %p46 = scmp.eq.s32.totalorder %s20, 0
      %p47 = por %p45, %p46
      %s49 = sadd.s32 %s48, 1
      %p52 = scmp.eq.s32.totalorder %s14, 2
      %p53 = scmp.ne.s32.totalorder %s48, %s50
      %p54 = scmp.eq.s32.totalorder %s14, 0
      %p55 = por %p53, %p54
      %p56 = scmp.ne.s32.totalorder %s48, %s50
      %p57 = scmp.eq.s32.totalorder %s19, 2
      %p58 = por %p56, %p57
      %p59 = scmp.ne.s32.totalorder %s50, %s51
      %p60 = scmp.eq.s32.totalorder %s19, 0
      %p61 = por %p59, %p60
      %p62 = scmp.ne.s32.totalorder %s50, %s51
      %p63 = scmp.eq.s32.totalorder %s20, 2
      %p64 = por %p62, %p63
      %p66 = scmp.ne.s32.totalorder %s51, %s65
      %p67 = scmp.eq.s32.totalorder %s20, 0
      %p68 = por %p66, %p67
      %s69 = ssub.s32 %s14, %s21
      %p70 = scmp.eq.s32.totalorder %s69, 0
      %s72 = sadd.s32 %s71, 1
      %s73 = scalar_select %p70, %s71, %s72
      %p76 = pneg %p70
      %p77 = scmp.eq.s32.totalorder %s14, 2
      %p78 = por %p76, %p77
      %p79 = scmp.ne.s32.totalorder %s71, %s74
      %p80 = scmp.eq.s32.totalorder %s14, 0
      %p81 = por %p79, %p80
      %p82 = scmp.ne.s32.totalorder %s71, %s74
      %p83 = scmp.eq.s32.totalorder %s19, 2
      %p84 = por %p82, %p83
      %p85 = scmp.ne.s32.totalorder %s74, %s75
      %p86 = scmp.eq.s32.totalorder %s19, 0
      %p87 = por %p85, %p86
      %p88 = scmp.ne.s32.totalorder %s74, %s75
      %p89 = scmp.eq.s32.totalorder %s20, 2
      %p90 = por %p88, %p89
      %p92 = scmp.ne.s32.totalorder %s75, %s91
      %p93 = scmp.eq.s32.totalorder %s20, 0
      %p94 = por %p92, %p93
      %p95 = scmp.le.s32.totalorder 1, %s14
      %p96 = scmp.lt.s32.totalorder %s14, 4
      %p97 = pnand %p95, %p96
      %p98 = pneg %p97
      // Predicated region
      $region9: #{tpu_custom_call.1} parent=5 // pred_check
        _
      $region10: #{tpu_custom_call.1} parent=5 // pred_check_branch
        %100 = sbr.rel (%p97) target = $region12
      $region11: #{tpu_custom_call.1} parent=5 // pred_region
        %s101 = ssub.s32 %s14, 1
        // Predicated region
        $region13: #{tpu_custom_call.1} parent=11 // pred_check
          %p102 = pneg %p61
        $region14: #{tpu_custom_call.1} parent=11 // pred_check_branch
          %104 = sbr.rel (%p102) target = $region16
        $region15: #{tpu_custom_call.1} parent=11 // pred_region
          _
        $region16: #{tpu_custom_call.1} parent=11 // pred_fallthru
          _
      $region12: #{tpu_custom_call.1} parent=5 // pred_fallthru
        _
      %p105 = scmp.lt.s32.totalorder %s14, 3
      // Predicated region
      $region17: #{tpu_custom_call.1} parent=5 // pred_check
        %p106 = pneg %p105
      $region18: #{tpu_custom_call.1} parent=5 // pred_check_branch
        %108 = sbr.rel (%p106) target = $region20
      $region19: #{tpu_custom_call.1} parent=5 // pred_region
        // Predicated region
        $region21: #{tpu_custom_call.1} parent=19 // pred_check
          %p109 = pneg %p34
        $region22: #{tpu_custom_call.1} parent=19 // pred_check_branch
          %111 = sbr.rel (%p109) target = $region24
        $region23: #{tpu_custom_call.1} parent=19 // pred_region
          %s112 = sand.u32 %s24, 1
          %s113 = scalar_lea.sflag [#allocation3], %s112
          %s114 = sand.u32 %s24, 1
          %s115 = smul.addr %s114, 8
          %s116 = scalar_lea.vmem [#allocation2], %s115
          %s118 = ssub.s32 128, 128
          %119 = vsyncadd %s113, %s118
          %s120 = smul.addr %s14, 128
          %s121 = scalar_lea.hbm %s0, %s120
          %s123 = sshll.u32 %s116, 4
          %s124 = int_to_ptr.vmem [resolvable:$true] %s123
          %126 = dma.hbm_to_vmem [thread:$0]  %s121, 128, %s124, %s113
        $region24: #{tpu_custom_call.1} parent=19 // pred_fallthru
          _
      $region20: #{tpu_custom_call.1} parent=5 // pred_fallthru
        _
      %p127 = scmp.le.s32.totalorder 1, %s14
      %p128 = scmp.lt.s32.totalorder %s14, 4
      %p129 = pnand %p127, %p128
      %p130 = pneg %p129
      // Predicated region
      $region25: #{tpu_custom_call.1} parent=5 // pred_check
        _
      $region26: #{tpu_custom_call.1} parent=5 // pred_check_branch
        %132 = sbr.rel (%p129) target = $region28
      $region27: #{tpu_custom_call.1} parent=5 // pred_region
        %s133 = ssub.s32 %s14, 1
        %s134 = sand.u32 %s27, 1
        %s135 = scalar_lea.sflag [#allocation3], %s134
        %s136 = sand.u32 %s27, 1
        %s137 = smul.addr %s136, 8
        %s138 = scalar_lea.vmem [#allocation2], %s137
        // Predicated region
        $region29: #{tpu_custom_call.1} parent=27 // pred_check
          %p139 = pneg %p40
        $region30: #{tpu_custom_call.1} parent=27 // pred_check_branch
          %141 = sbr.rel (%p139) target = $region32
        $region31: #{tpu_custom_call.1} parent=27 // pred_region
          %142 = dma.done %s135, 128
        $region32: #{tpu_custom_call.1} parent=27 // pred_fallthru
          _
        %s143 = sand.u32 %s27, 1
        %s144 = scalar_lea.sflag [#allocation3], %s143
        %s145 = sand.u32 %s27, 1
        %s146 = smul.addr %s145, 8
        %s147 = scalar_lea.vmem [#allocation2], %s146
        %p148 = pneg %p40
        %p149 = pneg %p37
        %p150 = pneg %p61
        %p151 = pneg %p58
        %p152 = pneg %p87
        %p153 = pneg %p84
        %s154 = sand.u32 %s74, 1
        %s155 = scalar_lea.sflag [#allocation4], %s154
        %s156 = sand.u32 %s74, 1
        %s157 = smul.addr %s156, 8
        %s158 = scalar_lea.vmem [#allocation5], %s157
        %v159 = vld [vmem:[%s138] sm:$0xff]
        %160 = vadd.xlane.f32.xlu0 %v159
        %v161 = vpop.xlane.xlu0 %160
        %v162 = vrcp.pop 128.0
        %v163 = vmul.f32 %v161, %v162
        %v164 = vsub.f32 %v159, %v163
        %v165 = vmul.f32 %v164, %v164
        %166 = vadd.xlane.f32.xlu0 %v165
        %v167 = vpop.xlane.xlu0 %166
        %v168 = vmul.f32 %v167, %v162
        %v169 = vadd.f32 %v168, 1e-05
        %v170 = vrsqrt.pop %v169
        %v171 = vmul.f32 %v164, %v170
        %v172 = vld [vmem:[%s1] sm:$0x1]
        %v174 = vlaneseq
        %v175 = vshrl.u32 %v174, 7
        %v176 = vsub.s32 0, %v175
        %v177 = vrot.slane %v172, %v176
        %v179 = vmul.f32 %v171, %v177
        %180 = vst [vmem:[%s158] sm:$0xff] %v179
        %s181 = sand.u32 %s74, 1
        %s182 = scalar_lea.sflag [#allocation4], %s181
        %s183 = sand.u32 %s74, 1
        %s184 = smul.addr %s183, 8
        %s185 = scalar_lea.vmem [#allocation5], %s184
        // Predicated region
        $region33: #{tpu_custom_call.1} parent=27 // pred_check
          %p186 = pneg %p84
        $region34: #{tpu_custom_call.1} parent=27 // pred_check_branch
          %188 = sbr.rel (%p186) target = $region36
        $region35: #{tpu_custom_call.1} parent=27 // pred_region
          %s190 = ssub.s32 128, 128
          %191 = vsyncadd %s182, %s190
          %s192 = smul.addr %s19, 128
          %s193 = scalar_lea.hbm %s2, %s192
          %s195 = sshll.u32 %s185, 4
          %s196 = int_to_ptr.vmem [resolvable:$true] %s195
          %198 = dma.vmem_to_hbm [thread:$0]  %s196, 128, %s193, %s182
        $region36: #{tpu_custom_call.1} parent=27 // pred_fallthru
          _
      $region28: #{tpu_custom_call.1} parent=5 // pred_fallthru
        _
      %p199 = scmp.le.s32.totalorder 2, %s14
      // Predicated region
      $region37: #{tpu_custom_call.1} parent=5 // pred_check
        %p200 = pneg %p199
      $region38: #{tpu_custom_call.1} parent=5 // pred_check_branch
        %202 = sbr.rel (%p200) target = $region40
      $region39: #{tpu_custom_call.1} parent=5 // pred_region
        %s203 = ssub.s32 %s14, 2
        // Predicated region
        $region41: #{tpu_custom_call.1} parent=39 // pred_check
          %p204 = pneg %p90
        $region42: #{tpu_custom_call.1} parent=39 // pred_check_branch
          %206 = sbr.rel (%p204) target = $region44
        $region43: #{tpu_custom_call.1} parent=39 // pred_region
          %s207 = sand.u32 %s75, 1
          %s208 = scalar_lea.sflag [#allocation4], %s207
          %s209 = sand.u32 %s75, 1
          %s210 = smul.addr %s209, 8
          %s211 = scalar_lea.vmem [#allocation5], %s210
          %212 = dma.done %s208, 128
        $region44: #{tpu_custom_call.1} parent=39 // pred_fallthru
          _
      $region40: #{tpu_custom_call.1} parent=5 // pred_fallthru
        _
    $region6: #{tpu_custom_call.1} parent=1 // loop_footer
      %s18 = sadd.s32 1, %s14
    $region7: #{tpu_custom_call.1} parent=1 // loop_footer_branch
      %13 = sbr.rel target = $region3
    $region8: #{tpu_custom_call.1} parent=1 // loop_exit
      _
    %213 = vsyncpa [#allocation3], 1
    %s214 = scalar_lea.sflag [#allocation3], 1
    %215 = vsyncpa %s214, 1
    %216 = vsyncpa [#allocation4], 1
    %s217 = scalar_lea.sflag [#allocation4], 1
    %218 = vsyncpa %s217, 1

</llo_original>
